<compile_context>
chip_gen: v7x
topology: tpu7x:2x2x1
jax: 0.10.0
libtpu: 0.0.40
codegen_flags: <defaults>
</compile_context>

<pallas_src>
import functools
import math

import jax
import jax.numpy as jnp
from jax import lax
from jax.experimental import pallas as pl
from jax.experimental.pallas import tpu as pltpu


def bessel_basis_kernel(x_ref, o_ref, *, n_rbf, theta_scale):
    # x_ref: (D, rows_tile, 128)   o_ref: (n_rbf, rows_tile, 128)
    D = x_ref.shape[0]

    # Squared norm without a cross-lane reduce: unrolled per-component FMAs on
    # full (rows_tile, 128) slabs (pure VPU work, all sublanes busy).
    x0 = x_ref[0].astype(jnp.float32)
    r2 = x0 * x0
    for d in range(1, D):
        xd = x_ref[d].astype(jnp.float32)
        r2 = r2 + xd * xd

    # PyTorch guard: where(inputs == 0, 1.0, inputs).  Apply the guard to r2
    # *before* rsqrt so rsqrt(0)=inf never appears.  One rsqrt per point
    # (EUP slot, otherwise idle), amortized across all n_rbf output rows.
    r2_safe = jnp.where(r2 == 0.0, jnp.float32(1.0), r2)
    inv = lax.rsqrt(r2_safe)            # == 1/r  (== 1 where r == 0, as torch)
    r = r2 * inv                        # == sqrt(r2) (exactly 0 where r2 == 0)

    # theta = r * pi / cutoff;  freqs_n * r = n * theta (exact harmonics).
    theta = r * jnp.float32(theta_scale)
    s1 = jnp.sin(theta)
    c1 = jnp.cos(theta)

    # Angle-addition recurrence: (s,c)_{n+1} = (s*c1 + c*s1, c*c1 - s*s1).
    # NOTE: valid only while freqs stay the non-trainable buffer n*pi/cutoff.
    s, c = s1, c1
    o_ref[0] = (s * inv).astype(o_ref.dtype)
    for k in range(1, n_rbf):
        s, c = s * c1 + c * s1, c * c1 - s * s1
        o_ref[k] = (s * inv).astype(o_ref.dtype)


def bessel_basis(x, *, cutoff=5.0, n_rbf=16, rows_tile=512):
    """x: (N, D) float32 -> (N, n_rbf) float32, matching BesselBasis.forward.

    rows_tile rows of 128 points per grid step (default 512 rows = 64K points,
    ~9.6 MB of double-buffered VMEM at D=3, n_rbf=16 -> under the 16 MiB v5e
    scoped default, so no vmem_limit override is needed on any generation).
    """
    N, D = x.shape
    lane = 128

    # Row-block the point axis: N -> (n_rows, 128), n_rows padded so that the
    # chosen tile divides it and the block shape satisfies the (8, 128) rule.
    n_rows = pl.cdiv(N, lane)
    tile_rows = max(8, min(rows_tile, pl.cdiv(n_rows, 8) * 8))
    tile_rows = pl.cdiv(tile_rows, 8) * 8
    n_rows_pad = pl.cdiv(n_rows, tile_rows) * tile_rows
    n_pad = n_rows_pad * lane

    # Lane/sublane-dense layout: (D, n_rows_pad, 128).  Zero padding rows give
    # r == 0 -> output 0, sliced off below.
    xt = x.T.astype(jnp.float32)
    if n_pad != N:
        xt = jnp.pad(xt, ((0, 0), (0, n_pad - N)))
    xt = xt.reshape(D, n_rows_pad, lane)

    kernel = functools.partial(
        bessel_basis_kernel, n_rbf=n_rbf, theta_scale=math.pi / cutoff)

    out_blk = pl.pallas_call(
        kernel,
        out_shape=jax.ShapeDtypeStruct((n_rbf, n_rows_pad, lane), jnp.float32),
        grid_spec=pltpu.PrefetchScalarGridSpec(
            num_scalar_prefetch=0,
            grid=(n_rows_pad // tile_rows,),
            in_specs=[pl.BlockSpec((D, tile_rows, lane), lambda i: (0, i, 0))],
            out_specs=pl.BlockSpec((n_rbf, tile_rows, lane),
                                   lambda i: (0, i, 0)),
        ),
        compiler_params=pltpu.CompilerParams(
            dimension_semantics=("parallel",),
        ),
    )(xt)

    # TODO(synk): downstream consumers could keep the lane-dense (n_rbf, N)
    # layout and fold this transpose into their first matmul; it is only kept
    # here to match BesselBasis.forward's (N, n_rbf) output contract.
    return out_blk.reshape(n_rbf, n_pad)[:, :N].T


def bessel_basis_reference(x, *, cutoff, n_rbf):
    freqs = jnp.arange(1, n_rbf + 1, dtype=jnp.float32) * (math.pi / cutoff)
    r = jnp.linalg.norm(x, ord=2, axis=1)
    ax = jnp.outer(r, freqs)
    sinax = jnp.sin(ax)
    denom = jnp.where(r == 0.0, 1.0, r)
    return sinax / denom[:, None]


if __name__ == "__main__":
    # Deterministic setup consistent with BesselBasis(cutoff=5.0, n_rbf=16).
    cutoff = 5.0
    n_rbf = 16
    N, D = 256, 3  # 256 edge displacement vectors in 3D

    key = jax.random.PRNGKey(0)
    x = jax.random.normal(key, (N, D), dtype=jnp.float32)
    x = x.at[0].set(0.0)  # exact zero vector exercises the where() guard

    y = bessel_basis(x, cutoff=cutoff, n_rbf=n_rbf)
    y = jax.block_until_ready(y)

    y_ref = bessel_basis_reference(x, cutoff=cutoff, n_rbf=n_rbf)
    assert y.shape == (N, n_rbf)
    # Slightly loose tolerance: the harmonic recurrence + rsqrt-based norm
    # differ from n_rbf independent libm sin() calls and a divide by a few
    # amplified ulps (still fp32-exact for all practical purposes).
    assert bool(jnp.allclose(y, y_ref, atol=1e-4, rtol=2e-4))

    print("KERNEL_OK")
</pallas_src>

<mosaic_0001>
module attributes {stable_mosaic.version = 11 : i64} {
  func.func @bessel_basis_kernel(%arg0: i32, %arg1: memref<3x8x128xf32, #tpu.memory_space<vmem>>, %arg2: memref<16x8x128xf32, #tpu.memory_space<vmem>>) attributes {dimension_semantics = [#tpu.dimension_semantics<parallel>], iteration_bounds = array<i64: 1>, scalar_prefetch = 0 : i64, scratch_operands = 0 : i64, tpu.core_type = #tpu.core_type<tc>, window_params = [{transform_indices = @transform_0, window_bounds = array<i64: 3, 8, 128>}, {transform_indices = @transform_1, window_bounds = array<i64: 16, 8, 128>}]} {
    %c0 = arith.constant 0 : index
    %c0_0 = arith.constant 0 : index
    %c0_1 = arith.constant 0 : index
    %0 = vector.load %arg1[%c0, %c0_0, %c0_1] : memref<3x8x128xf32, #tpu.memory_space<vmem>>, vector<1x8x128xf32>
    %1 = vector.shape_cast %0 : vector<1x8x128xf32> to vector<8x128xf32>
    %2 = arith.mulf %1, %1 : vector<8x128xf32>
    %c1 = arith.constant 1 : index
    %c0_2 = arith.constant 0 : index
    %c0_3 = arith.constant 0 : index
    %3 = vector.load %arg1[%c1, %c0_2, %c0_3] : memref<3x8x128xf32, #tpu.memory_space<vmem>>, vector<1x8x128xf32>
    %4 = vector.shape_cast %3 : vector<1x8x128xf32> to vector<8x128xf32>
    %5 = arith.mulf %4, %4 : vector<8x128xf32>
    %6 = arith.addf %2, %5 : vector<8x128xf32>
    %c2 = arith.constant 2 : index
    %c0_4 = arith.constant 0 : index
    %c0_5 = arith.constant 0 : index
    %7 = vector.load %arg1[%c2, %c0_4, %c0_5] : memref<3x8x128xf32, #tpu.memory_space<vmem>>, vector<1x8x128xf32>
    %8 = vector.shape_cast %7 : vector<1x8x128xf32> to vector<8x128xf32>
    %9 = arith.mulf %8, %8 : vector<8x128xf32>
    %10 = arith.addf %6, %9 : vector<8x128xf32>
    %cst = arith.constant 0.000000e+00 : f32
    %11 = vector.broadcast %cst : f32 to vector<8x128xf32>
    %12 = arith.cmpf oeq, %10, %11 : vector<8x128xf32>
    %cst_6 = arith.constant 1.000000e+00 : f32
    %13 = vector.broadcast %cst_6 : f32 to vector<8x128xf32>
    %14 = arith.select %12, %13, %10 : vector<8x128xi1>, vector<8x128xf32>
    %15 = math.rsqrt %14 : vector<8x128xf32>
    %16 = arith.mulf %10, %15 : vector<8x128xf32>
    %cst_7 = arith.constant 0.628318548 : f32
    %17 = vector.broadcast %cst_7 : f32 to vector<8x128xf32>
    %18 = arith.mulf %16, %17 : vector<8x128xf32>
    %19 = math.sin %18 : vector<8x128xf32>
    %20 = math.cos %18 : vector<8x128xf32>
    %21 = arith.mulf %19, %15 : vector<8x128xf32>
    %c0_8 = arith.constant 0 : index
    %c0_9 = arith.constant 0 : index
    %c0_10 = arith.constant 0 : index
    %22 = vector.load %arg2[%c0_8, %c0_9, %c0_10] : memref<16x8x128xf32, #tpu.memory_space<vmem>>, vector<1x8x128xf32>
    %23 = vector.shape_cast %22 : vector<1x8x128xf32> to vector<8x128xf32>
    %24 = vector.shape_cast %21 : vector<8x128xf32> to vector<1x8x128xf32>
    tpu.vector_store %arg2[%c0_8, %c0_9, %c0_10], %24 {strides = array<i32>} : memref<16x8x128xf32, #tpu.memory_space<vmem>>, vector<1x8x128xf32>,
    %25 = arith.mulf %19, %20 : vector<8x128xf32>
    %26 = arith.mulf %20, %19 : vector<8x128xf32>
    %27 = arith.addf %25, %26 : vector<8x128xf32>
    %28 = arith.mulf %20, %20 : vector<8x128xf32>
    %29 = arith.mulf %19, %19 : vector<8x128xf32>
    %30 = arith.subf %28, %29 : vector<8x128xf32>
    %31 = arith.mulf %27, %15 : vector<8x128xf32>
    %c1_11 = arith.constant 1 : index
    %c0_12 = arith.constant 0 : index
    %c0_13 = arith.constant 0 : index
    %32 = vector.load %arg2[%c1_11, %c0_12, %c0_13] : memref<16x8x128xf32, #tpu.memory_space<vmem>>, vector<1x8x128xf32>
    %33 = vector.shape_cast %32 : vector<1x8x128xf32> to vector<8x128xf32>
    %34 = vector.shape_cast %31 : vector<8x128xf32> to vector<1x8x128xf32>
    tpu.vector_store %arg2[%c1_11, %c0_12, %c0_13], %34 {strides = array<i32>} : memref<16x8x128xf32, #tpu.memory_space<vmem>>, vector<1x8x128xf32>,
    %35 = arith.mulf %27, %20 : vector<8x128xf32>
    %36 = arith.mulf %30, %19 : vector<8x128xf32>
    %37 = arith.addf %35, %36 : vector<8x128xf32>
    %38 = arith.mulf %30, %20 : vector<8x128xf32>
    %39 = arith.mulf %27, %19 : vector<8x128xf32>
    %40 = arith.subf %38, %39 : vector<8x128xf32>
    %41 = arith.mulf %37, %15 : vector<8x128xf32>
    %c2_14 = arith.constant 2 : index
    %c0_15 = arith.constant 0 : index
    %c0_16 = arith.constant 0 : index
    %42 = vector.load %arg2[%c2_14, %c0_15, %c0_16] : memref<16x8x128xf32, #tpu.memory_space<vmem>>, vector<1x8x128xf32>
    %43 = vector.shape_cast %42 : vector<1x8x128xf32> to vector<8x128xf32>
    %44 = vector.shape_cast %41 : vector<8x128xf32> to vector<1x8x128xf32>
    tpu.vector_store %arg2[%c2_14, %c0_15, %c0_16], %44 {strides = array<i32>} : memref<16x8x128xf32, #tpu.memory_space<vmem>>, vector<1x8x128xf32>,
    %45 = arith.mulf %37, %20 : vector<8x128xf32>
    %46 = arith.mulf %40, %19 : vector<8x128xf32>
    %47 = arith.addf %45, %46 : vector<8x128xf32>
    %48 = arith.mulf %40, %20 : vector<8x128xf32>
    %49 = arith.mulf %37, %19 : vector<8x128xf32>
    %50 = arith.subf %48, %49 : vector<8x128xf32>
    %51 = arith.mulf %47, %15 : vector<8x128xf32>
    %c3 = arith.constant 3 : index
    %c0_17 = arith.constant 0 : index
    %c0_18 = arith.constant 0 : index
    %52 = vector.load %arg2[%c3, %c0_17, %c0_18] : memref<16x8x128xf32, #tpu.memory_space<vmem>>, vector<1x8x128xf32>
    %53 = vector.shape_cast %52 : vector<1x8x128xf32> to vector<8x128xf32>
    %54 = vector.shape_cast %51 : vector<8x128xf32> to vector<1x8x128xf32>
    tpu.vector_store %arg2[%c3, %c0_17, %c0_18], %54 {strides = array<i32>} : memref<16x8x128xf32, #tpu.memory_space<vmem>>, vector<1x8x128xf32>,
    %55 = arith.mulf %47, %20 : vector<8x128xf32>
    %56 = arith.mulf %50, %19 : vector<8x128xf32>
    %57 = arith.addf %55, %56 : vector<8x128xf32>
    %58 = arith.mulf %50, %20 : vector<8x128xf32>
    %59 = arith.mulf %47, %19 : vector<8x128xf32>
    %60 = arith.subf %58, %59 : vector<8x128xf32>
    %61 = arith.mulf %57, %15 : vector<8x128xf32>
    %c4 = arith.constant 4 : index
    %c0_19 = arith.constant 0 : index
    %c0_20 = arith.constant 0 : index
    %62 = vector.load %arg2[%c4, %c0_19, %c0_20] : memref<16x8x128xf32, #tpu.memory_space<vmem>>, vector<1x8x128xf32>
    %63 = vector.shape_cast %62 : vector<1x8x128xf32> to vector<8x128xf32>
    %64 = vector.shape_cast %61 : vector<8x128xf32> to vector<1x8x128xf32>
    tpu.vector_store %arg2[%c4, %c0_19, %c0_20], %64 {strides = array<i32>} : memref<16x8x128xf32, #tpu.memory_space<vmem>>, vector<1x8x128xf32>,
    %65 = arith.mulf %57, %20 : vector<8x128xf32>
    %66 = arith.mulf %60, %19 : vector<8x128xf32>
    %67 = arith.addf %65, %66 : vector<8x128xf32>
    %68 = arith.mulf %60, %20 : vector<8x128xf32>
    %69 = arith.mulf %57, %19 : vector<8x128xf32>
    %70 = arith.subf %68, %69 : vector<8x128xf32>
    %71 = arith.mulf %67, %15 : vector<8x128xf32>
    %c5 = arith.constant 5 : index
    %c0_21 = arith.constant 0 : index
    %c0_22 = arith.constant 0 : index
    %72 = vector.load %arg2[%c5, %c0_21, %c0_22] : memref<16x8x128xf32, #tpu.memory_space<vmem>>, vector<1x8x128xf32>
    %73 = vector.shape_cast %72 : vector<1x8x128xf32> to vector<8x128xf32>
    %74 = vector.shape_cast %71 : vector<8x128xf32> to vector<1x8x128xf32>
    tpu.vector_store %arg2[%c5, %c0_21, %c0_22], %74 {strides = array<i32>} : memref<16x8x128xf32, #tpu.memory_space<vmem>>, vector<1x8x128xf32>,
    %75 = arith.mulf %67, %20 : vector<8x128xf32>
    %76 = arith.mulf %70, %19 : vector<8x128xf32>
    %77 = arith.addf %75, %76 : vector<8x128xf32>
    %78 = arith.mulf %70, %20 : vector<8x128xf32>
    %79 = arith.mulf %67, %19 : vector<8x128xf32>
    %80 = arith.subf %78, %79 : vector<8x128xf32>
    %81 = arith.mulf %77, %15 : vector<8x128xf32>
    %c6 = arith.constant 6 : index
    %c0_23 = arith.constant 0 : index
    %c0_24 = arith.constant 0 : index
    %82 = vector.load %arg2[%c6, %c0_23, %c0_24] : memref<16x8x128xf32, #tpu.memory_space<vmem>>, vector<1x8x128xf32>
    %83 = vector.shape_cast %82 : vector<1x8x128xf32> to vector<8x128xf32>
    %84 = vector.shape_cast %81 : vector<8x128xf32> to vector<1x8x128xf32>
    tpu.vector_store %arg2[%c6, %c0_23, %c0_24], %84 {strides = array<i32>} : memref<16x8x128xf32, #tpu.memory_space<vmem>>, vector<1x8x128xf32>,
    %85 = arith.mulf %77, %20 : vector<8x128xf32>
    %86 = arith.mulf %80, %19 : vector<8x128xf32>
    %87 = arith.addf %85, %86 : vector<8x128xf32>
    %88 = arith.mulf %80, %20 : vector<8x128xf32>
    %89 = arith.mulf %77, %19 : vector<8x128xf32>
    %90 = arith.subf %88, %89 : vector<8x128xf32>
    %91 = arith.mulf %87, %15 : vector<8x128xf32>
    %c7 = arith.constant 7 : index
    %c0_25 = arith.constant 0 : index
    %c0_26 = arith.constant 0 : index
    %92 = vector.load %arg2[%c7, %c0_25, %c0_26] : memref<16x8x128xf32, #tpu.memory_space<vmem>>, vector<1x8x128xf32>
    %93 = vector.shape_cast %92 : vector<1x8x128xf32> to vector<8x128xf32>
    %94 = vector.shape_cast %91 : vector<8x128xf32> to vector<1x8x128xf32>
    tpu.vector_store %arg2[%c7, %c0_25, %c0_26], %94 {strides = array<i32>} : memref<16x8x128xf32, #tpu.memory_space<vmem>>, vector<1x8x128xf32>,
    %95 = arith.mulf %87, %20 : vector<8x128xf32>
    %96 = arith.mulf %90, %19 : vector<8x128xf32>
    %97 = arith.addf %95, %96 : vector<8x128xf32>
    %98 = arith.mulf %90, %20 : vector<8x128xf32>
    %99 = arith.mulf %87, %19 : vector<8x128xf32>
    %100 = arith.subf %98, %99 : vector<8x128xf32>
    %101 = arith.mulf %97, %15 : vector<8x128xf32>
    %c8 = arith.constant 8 : index
    %c0_27 = arith.constant 0 : index
    %c0_28 = arith.constant 0 : index
    %102 = vector.load %arg2[%c8, %c0_27, %c0_28] : memref<16x8x128xf32, #tpu.memory_space<vmem>>, vector<1x8x128xf32>
    %103 = vector.shape_cast %102 : vector<1x8x128xf32> to vector<8x128xf32>
    %104 = vector.shape_cast %101 : vector<8x128xf32> to vector<1x8x128xf32>
    tpu.vector_store %arg2[%c8, %c0_27, %c0_28], %104 {strides = array<i32>} : memref<16x8x128xf32, #tpu.memory_space<vmem>>, vector<1x8x128xf32>,
    %105 = arith.mulf %97, %20 : vector<8x128xf32>
    %106 = arith.mulf %100, %19 : vector<8x128xf32>
    %107 = arith.addf %105, %106 : vector<8x128xf32>
    %108 = arith.mulf %100, %20 : vector<8x128xf32>
    %109 = arith.mulf %97, %19 : vector<8x128xf32>
    %110 = arith.subf %108, %109 : vector<8x128xf32>
    %111 = arith.mulf %107, %15 : vector<8x128xf32>
    %c9 = arith.constant 9 : index
    %c0_29 = arith.constant 0 : index
    %c0_30 = arith.constant 0 : index
    %112 = vector.load %arg2[%c9, %c0_29, %c0_30] : memref<16x8x128xf32, #tpu.memory_space<vmem>>, vector<1x8x128xf32>
    %113 = vector.shape_cast %112 : vector<1x8x128xf32> to vector<8x128xf32>
    %114 = vector.shape_cast %111 : vector<8x128xf32> to vector<1x8x128xf32>
    tpu.vector_store %arg2[%c9, %c0_29, %c0_30], %114 {strides = array<i32>} : memref<16x8x128xf32, #tpu.memory_space<vmem>>, vector<1x8x128xf32>,
    %115 = arith.mulf %107, %20 : vector<8x128xf32>
    %116 = arith.mulf %110, %19 : vector<8x128xf32>
    %117 = arith.addf %115, %116 : vector<8x128xf32>
    %118 = arith.mulf %110, %20 : vector<8x128xf32>
    %119 = arith.mulf %107, %19 : vector<8x128xf32>
    %120 = arith.subf %118, %119 : vector<8x128xf32>
    %121 = arith.mulf %117, %15 : vector<8x128xf32>
    %c10 = arith.constant 10 : index
    %c0_31 = arith.constant 0 : index
    %c0_32 = arith.constant 0 : index
    %122 = vector.load %arg2[%c10, %c0_31, %c0_32] : memref<16x8x128xf32, #tpu.memory_space<vmem>>, vector<1x8x128xf32>
    %123 = vector.shape_cast %122 : vector<1x8x128xf32> to vector<8x128xf32>
    %124 = vector.shape_cast %121 : vector<8x128xf32> to vector<1x8x128xf32>
    tpu.vector_store %arg2[%c10, %c0_31, %c0_32], %124 {strides = array<i32>} : memref<16x8x128xf32, #tpu.memory_space<vmem>>, vector<1x8x128xf32>,
    %125 = arith.mulf %117, %20 : vector<8x128xf32>
    %126 = arith.mulf %120, %19 : vector<8x128xf32>
    %127 = arith.addf %125, %126 : vector<8x128xf32>
    %128 = arith.mulf %120, %20 : vector<8x128xf32>
    %129 = arith.mulf %117, %19 : vector<8x128xf32>
    %130 = arith.subf %128, %129 : vector<8x128xf32>
    %131 = arith.mulf %127, %15 : vector<8x128xf32>
    %c11 = arith.constant 11 : index
    %c0_33 = arith.constant 0 : index
    %c0_34 = arith.constant 0 : index
    %132 = vector.load %arg2[%c11, %c0_33, %c0_34] : memref<16x8x128xf32, #tpu.memory_space<vmem>>, vector<1x8x128xf32>
    %133 = vector.shape_cast %132 : vector<1x8x128xf32> to vector<8x128xf32>
    %134 = vector.shape_cast %131 : vector<8x128xf32> to vector<1x8x128xf32>
    tpu.vector_store %arg2[%c11, %c0_33, %c0_34], %134 {strides = array<i32>} : memref<16x8x128xf32, #tpu.memory_space<vmem>>, vector<1x8x128xf32>,
    %135 = arith.mulf %127, %20 : vector<8x128xf32>
    %136 = arith.mulf %130, %19 : vector<8x128xf32>
    %137 = arith.addf %135, %136 : vector<8x128xf32>
    %138 = arith.mulf %130, %20 : vector<8x128xf32>
    %139 = arith.mulf %127, %19 : vector<8x128xf32>
    %140 = arith.subf %138, %139 : vector<8x128xf32>
    %141 = arith.mulf %137, %15 : vector<8x128xf32>
    %c12 = arith.constant 12 : index
    %c0_35 = arith.constant 0 : index
    %c0_36 = arith.constant 0 : index
    %142 = vector.load %arg2[%c12, %c0_35, %c0_36] : memref<16x8x128xf32, #tpu.memory_space<vmem>>, vector<1x8x128xf32>
    %143 = vector.shape_cast %142 : vector<1x8x128xf32> to vector<8x128xf32>
    %144 = vector.shape_cast %141 : vector<8x128xf32> to vector<1x8x128xf32>
    tpu.vector_store %arg2[%c12, %c0_35, %c0_36], %144 {strides = array<i32>} : memref<16x8x128xf32, #tpu.memory_space<vmem>>, vector<1x8x128xf32>,
    %145 = arith.mulf %137, %20 : vector<8x128xf32>
    %146 = arith.mulf %140, %19 : vector<8x128xf32>
    %147 = arith.addf %145, %146 : vector<8x128xf32>
    %148 = arith.mulf %140, %20 : vector<8x128xf32>
    %149 = arith.mulf %137, %19 : vector<8x128xf32>
    %150 = arith.subf %148, %149 : vector<8x128xf32>
    %151 = arith.mulf %147, %15 : vector<8x128xf32>
    %c13 = arith.constant 13 : index
    %c0_37 = arith.constant 0 : index
    %c0_38 = arith.constant 0 : index
    %152 = vector.load %arg2[%c13, %c0_37, %c0_38] : memref<16x8x128xf32, #tpu.memory_space<vmem>>, vector<1x8x128xf32>
    %153 = vector.shape_cast %152 : vector<1x8x128xf32> to vector<8x128xf32>
    %154 = vector.shape_cast %151 : vector<8x128xf32> to vector<1x8x128xf32>
    tpu.vector_store %arg2[%c13, %c0_37, %c0_38], %154 {strides = array<i32>} : memref<16x8x128xf32, #tpu.memory_space<vmem>>, vector<1x8x128xf32>,
    %155 = arith.mulf %147, %20 : vector<8x128xf32>
    %156 = arith.mulf %150, %19 : vector<8x128xf32>
    %157 = arith.addf %155, %156 : vector<8x128xf32>
    %158 = arith.mulf %150, %20 : vector<8x128xf32>
    %159 = arith.mulf %147, %19 : vector<8x128xf32>
    %160 = arith.subf %158, %159 : vector<8x128xf32>
    %161 = arith.mulf %157, %15 : vector<8x128xf32>
    %c14 = arith.constant 14 : index
    %c0_39 = arith.constant 0 : index
    %c0_40 = arith.constant 0 : index
    %162 = vector.load %arg2[%c14, %c0_39, %c0_40] : memref<16x8x128xf32, #tpu.memory_space<vmem>>, vector<1x8x128xf32>
    %163 = vector.shape_cast %162 : vector<1x8x128xf32> to vector<8x128xf32>
    %164 = vector.shape_cast %161 : vector<8x128xf32> to vector<1x8x128xf32>
    tpu.vector_store %arg2[%c14, %c0_39, %c0_40], %164 {strides = array<i32>} : memref<16x8x128xf32, #tpu.memory_space<vmem>>, vector<1x8x128xf32>,
    %165 = arith.mulf %157, %20 : vector<8x128xf32>
    %166 = arith.mulf %160, %19 : vector<8x128xf32>
    %167 = arith.addf %165, %166 : vector<8x128xf32>
    %168 = arith.mulf %167, %15 : vector<8x128xf32>
    %c15 = arith.constant 15 : index
    %c0_41 = arith.constant 0 : index
    %c0_42 = arith.constant 0 : index
    %169 = vector.load %arg2[%c15, %c0_41, %c0_42] : memref<16x8x128xf32, #tpu.memory_space<vmem>>, vector<1x8x128xf32>
    %170 = vector.shape_cast %169 : vector<1x8x128xf32> to vector<8x128xf32>
    %171 = vector.shape_cast %168 : vector<8x128xf32> to vector<1x8x128xf32>
    tpu.vector_store %arg2[%c15, %c0_41, %c0_42], %171 {strides = array<i32>} : memref<16x8x128xf32, #tpu.memory_space<vmem>>, vector<1x8x128xf32>,
    return
  }
  func.func @transform_0(%arg0: i32) -> (i32, i32, i32) {
    %c0_i32 = arith.constant 0 : i32
    %c0_i32_0 = arith.constant 0 : i32
    %c0_i32_1 = arith.constant 0 : i32
    return %c0_i32, %arg0, %c0_i32_0 : i32, i32, i32
  }
  func.func @transform_1(%arg0: i32) -> (i32, i32, i32) {
    %c0_i32 = arith.constant 0 : i32
    %c0_i32_0 = arith.constant 0 : i32
    %c0_i32_1 = arith.constant 0 : i32
    return %c0_i32, %arg0, %c0_i32_0 : i32, i32, i32
  }
}

</mosaic_0001>

<llo_original>
// kernel: tpu_custom_call.1
$region0: #{tpu_custom_call.1}
  #allocation0 [shape = 'u32[]', space=smem, size = 0x4, offset = 0x4, fixed_abs, tag = 'smem constant byte address 0x4 - core index']
  #allocation1 [shape = 'u32[144,128]{1,0:T(1,128)}', space=vmem, size = 0x12000, scoped, tag = 'internal scratch']
  %s0 = inlined_call_operand.hbm [shape: f32[3,8,128], index: 0, kind: input, shape index: {}]
  %s1 = inlined_call_operand.hbm [shape: f32[16,8,128], index: 1, kind: output, shape index: {}]
  %s2 = sld [smem:[#allocation0]]
  $region18: #{tpu_custom_call.1} parent=0
    _
  %s4 = ssub.s32 1, %s2
  %s5 = scalar_select 0, %s4, %s2
  $region1: #{tpu_custom_call.1} parent=0
    #allocation2 [shape = 'u8[12288]{0}', space=vmem, size = 0x3000, scoped, tag = 'input window, operand 0, single buffered']
    #allocation3 [shape = 's32[1]{0}', space=sflag, size = 0x4, scoped, tag = 'scoped memory for tpu_custom_call.1']
    #allocation4 [shape = 's32[1]{0}', space=sflag, size = 0x4, scoped, tag = 'scoped memory for tpu_custom_call.1']
    #allocation5 [shape = 'u8[65536]{0}', space=vmem, size = 0x10000, scoped, tag = 'output window, operand 0, single buffered']
    %6 = vsyncpa [#allocation3], 0
    %7 = vsyncpa [#allocation4], 0
    // Predicated region
    $region2: #{tpu_custom_call.1} parent=1 // pred_check
      _
    $region3: #{tpu_custom_call.1} parent=1 // pred_check_branch
      %9 = sbr.rel (0) target = $region5
    $region4: #{tpu_custom_call.1} parent=1 // pred_region
      %s11 = ssub.s32 384, 384
      %12 = vsyncadd [#allocation3], %s11
      %s13 = sshll.u32 [#allocation2], 4
      %s14 = int_to_ptr.vmem [resolvable:$true] %s13
      %19 = dma.hbm_to_vmem [thread:$0]  %s0, 384, %s14, [#allocation3], 128, 128, 8
    $region5: #{tpu_custom_call.1} parent=1 // pred_fallthru
      _
    // Predicated region
    $region6: #{tpu_custom_call.1} parent=1 // pred_check
      _
    $region7: #{tpu_custom_call.1} parent=1 // pred_check_branch
      %21 = sbr.rel (0) target = $region9
    $region8: #{tpu_custom_call.1} parent=1 // pred_region
      %22 = dma.done [#allocation3], 384
    $region9: #{tpu_custom_call.1} parent=1 // pred_fallthru
      _
    %v23 = vld [vmem:[#allocation2] sm:$0xff]
    %v24 = vmul.f32 %v23, %v23
    %s25 = scalar_lea.vmem [#allocation2], 8
    %v26 = vld [vmem:[%s25] sm:$0xff]
    %v27 = vmul.f32 %v26, %v26
    %v28 = vadd.f32 %v24, %v27
    %s29 = scalar_lea.vmem [#allocation2], 16
    %v30 = vld [vmem:[%s29] sm:$0xff]
    %v31 = vmul.f32 %v30, %v30
    %v32 = vadd.f32 %v28, %v31
    %vm33 = vcmp.eq.f32.partialorder %v32, 0.0
    %v34 = vsel %vm33, 1.0, %v32
    %v35 = vrsqrt.pop %v34
    %v36 = vmul.f32 %v32, %v35
    %v37 = vmul.f32 %v36, 0.62831855
    %v38 = vand.u32 2147483647, %v37
    %vm39 = vcmp.le.f32.partialorder %v38, 0.7853982
    %vm40 = vcmp.lt.s32.totalorder %v37, 0
    %v41 = vand.u32 %v37, 2139095040
    %v42 = vshrl.u32 %v41, 23
    %v43 = vsub.s32 %v42, 127
    %v44 = vand.u32 2147483647, %v37
    %v45 = vand.u32 %v44, 8388607
    %v46 = vor.u32 %v45, 8388608
    %v47 = vsub.s32 0, %v46
    %v48 = vadd.s32 %v43, 1
    %vm49 = vcmp.gt.s32.totalorder %v48, 0
    %v50 = vsel %vm49, %v48, 0
    %v51 = vshrl.u32 %v50, 5
    %v52 = vand.u32 %v50, 31
    %v53 = vsub.s32 32, %v52
    %v54 = vshrl.u32 683565275, %v53
    %v55 = vshll.u32 683565275, %v52
    %v56 = vshrl.u32 2475754826, %v53
    %v57 = vor.u32 %v55, %v56
    %v58 = vshll.u32 2475754826, %v52
    %v59 = vshrl.u32 2131351028, %v53
    %v60 = vor.u32 %v58, %v59
    %v61 = vshll.u32 2131351028, %v52
    %v62 = vshrl.u32 2102212464, %v53
    %v63 = vor.u32 %v61, %v62
    %v64 = vshll.u32 2102212464, %v52
    %v65 = vshrl.u32 920167782, %v53
    %v66 = vor.u32 %v64, %v65
    %v67 = vshll.u32 920167782, %v52
    %v68 = vshrl.u32 1326507024, %v53
    %v69 = vor.u32 %v67, %v68
    %vm70 = vcmp.lt.s32.totalorder %v51, 1
    %vm71 = vcmp.lt.s32.totalorder %v51, 2
    %vm72 = vcmp.lt.s32.totalorder %v51, 3
    %vm73 = vcmp.lt.s32.totalorder %v51, 4
    %v74 = vsel %vm70, %v54, %v57
    %v75 = vsel %vm73, %v63, 2102212464
    %v76 = vsel %vm72, %v60, %v75
    %v77 = vsel %vm71, %v74, %v76
    %v78 = vsel %vm70, %v57, %v60
    %v79 = vsel %vm73, %v66, 920167782
    %v80 = vsel %vm72, %v63, %v79
    %v81 = vsel %vm71, %v78, %v80
    %v82 = vsel %vm70, %v60, %v63
    %v83 = vsel %vm73, %v69, 1326507024
    %v84 = vsel %vm72, %v66, %v83
    %v85 = vsel %vm71, %v82, %v84
    %v86 = vshll.u32 %v46, 8
    %v87 = vmul.u32.u64.compose %v86, %v85
    %v88 = vextract.low.u32 %v87
    %v89 = vextract.high.u32 %v87
    %v90 = vmul.u32.u64.compose %v86, %v81
    %v91 = vextract.low.u32 %v90
    %v92 = vextract.high.u32 %v90
    %v93 = vmul.u32 %v86, %v77
    %v94 = vadd.s32 %v89, %v91
    %vm95 = vc.u32 %v89, %v91
    %v96 = vadd.s32 %v92, 1
    %v97 = vsel %vm95, %v96, %v92
    %v98 = vadd.s32 %v93, %v97
    %v99 = vadd.s32 %v98, 536870912
    %v100 = vshrl.u32 %v99, 30
    %v101 = vshll.u32 %v100, 30
    %v102 = vsub.s32 %v98, %v101
    %vm103 = vcmp.lt.s32.totalorder %v102, 0
    %v104 = vsub.s32 0, %v102
    %v105 = vsel %vm103, %v104, %v102
    %v106 = vclz %v105
    %v107 = vsub.s32 %v106, 2
    %vm108 = vcmp.gt.s32.totalorder 0, %v107
    %v109 = vsel %vm108, 0, %v107
    %v110 = vsub.s32 32, %v109
    %v111 = vshll.u32 %v102, %v109
    %v112 = vshrl.u32 %v94, %v110
    %v113 = vor.u32 %v111, %v112
    %v114 = vsub.s32 4294967266, %v109
    %v115 = vadd.s32 %v114, 127
    %v116 = vshll.u32 %v115, 23
    %v117 = vor.u32 4788187, %v116
    %v118 = vand.u32 2147483647, %v117
    %v120 = vcvt.s32.f32 %v113
    %v121 = vmul.f32 %v120, %v118
    %v122 = vxor.u32 %v121, 2147483648
    %v123 = vsel %vm40, %v122, %v121
    %v124 = vsub.s32 4, %v100
    %v125 = vsel %vm40, %v124, %v100
    %v126 = vsel %vm39, %v37, %v123
    %v127 = vsel %vm39, 0, %v125
    %v128 = vcosq.f32.pop %v126
    %v129 = vsinq.f32.pop %v126
    %vm130 = vweird.f32 %v37
    %v131 = vadd.s32 %v127, 3
    %v132 = vand.u32 %v131, 3
    %vm133 = vcmp.lt.s32.totalorder %v132, 2
    %vm134 = vcmp.eq.s32.totalorder %v132, 0
    %v135 = vxor.u32 %v129, 2147483648
    %v136 = vsel %vm134, %v128, %v135
    %vm137 = vcmp.eq.s32.totalorder %v132, 2
    %v138 = vxor.u32 %v128, 2147483648
    %v139 = vsel %vm137, %v138, %v129
    %v140 = vsel %vm133, %v136, %v139
    %v141 = vsel %vm130, nan, %v140
    %v142 = vand.u32 2147483647, %v37
    %vm143 = vcmp.le.f32.partialorder %v142, 0.7853982
    %vm144 = vcmp.lt.s32.totalorder %v37, 0
    %v145 = vand.u32 %v37, 2139095040
    %v146 = vshrl.u32 %v145, 23
    %v147 = vsub.s32 %v146, 127
    %v148 = vand.u32 2147483647, %v37
    %v149 = vand.u32 %v148, 8388607
    %v150 = vor.u32 %v149, 8388608
    %v151 = vsub.s32 0, %v150
    %v152 = vadd.s32 %v147, 1
    %vm153 = vcmp.gt.s32.totalorder %v152, 0
    %v154 = vsel %vm153, %v152, 0
    %v155 = vshrl.u32 %v154, 5
    %v156 = vand.u32 %v154, 31
    %v157 = vsub.s32 32, %v156
    %v158 = vshrl.u32 683565275, %v157
    %v159 = vshll.u32 683565275, %v156
    %v160 = vshrl.u32 2475754826, %v157
    %v161 = vor.u32 %v159, %v160
    %v162 = vshll.u32 2475754826, %v156
    %v163 = vshrl.u32 2131351028, %v157
    %v164 = vor.u32 %v162, %v163
    %v165 = vshll.u32 2131351028, %v156
    %v166 = vshrl.u32 2102212464, %v157
    %v167 = vor.u32 %v165, %v166
    %v168 = vshll.u32 2102212464, %v156
    %v169 = vshrl.u32 920167782, %v157
    %v170 = vor.u32 %v168, %v169
    %v171 = vshll.u32 920167782, %v156
    %v172 = vshrl.u32 1326507024, %v157
    %v173 = vor.u32 %v171, %v172
    %vm174 = vcmp.lt.s32.totalorder %v155, 1
    %vm175 = vcmp.lt.s32.totalorder %v155, 2
    %vm176 = vcmp.lt.s32.totalorder %v155, 3
    %vm177 = vcmp.lt.s32.totalorder %v155, 4
    %v178 = vsel %vm174, %v158, %v161
    %v179 = vsel %vm177, %v167, 2102212464
    %v180 = vsel %vm176, %v164, %v179
    %v181 = vsel %vm175, %v178, %v180
    %v182 = vsel %vm174, %v161, %v164
    %v183 = vsel %vm177, %v170, 920167782
    %v184 = vsel %vm176, %v167, %v183
    %v185 = vsel %vm175, %v182, %v184
    %v186 = vsel %vm174, %v164, %v167
    %v187 = vsel %vm177, %v173, 1326507024
    %v188 = vsel %vm176, %v170, %v187
    %v189 = vsel %vm175, %v186, %v188
    %v190 = vshll.u32 %v150, 8
    %v191 = vmul.u32.u64.compose %v190, %v189
    %v192 = vextract.low.u32 %v191
    %v193 = vextract.high.u32 %v191
    %v194 = vmul.u32.u64.compose %v190, %v185
    %v195 = vextract.low.u32 %v194
    %v196 = vextract.high.u32 %v194
    %v197 = vmul.u32 %v190, %v181
    %v198 = vadd.s32 %v193, %v195
    %vm199 = vc.u32 %v193, %v195
    %v200 = vadd.s32 %v196, 1
    %v201 = vsel %vm199, %v200, %v196
    %v202 = vadd.s32 %v197, %v201
    %v203 = vadd.s32 %v202, 536870912
    %v204 = vshrl.u32 %v203, 30
    %v205 = vshll.u32 %v204, 30
    %v206 = vsub.s32 %v202, %v205
    %vm207 = vcmp.lt.s32.totalorder %v206, 0
    %v208 = vsub.s32 0, %v206
    %v209 = vsel %vm207, %v208, %v206
    %v210 = vclz %v209
    %v211 = vsub.s32 %v210, 2
    %vm212 = vcmp.gt.s32.totalorder 0, %v211
    %v213 = vsel %vm212, 0, %v211
    %v214 = vsub.s32 32, %v213
    %v215 = vshll.u32 %v206, %v213
    %v216 = vshrl.u32 %v198, %v214
    %v217 = vor.u32 %v215, %v216
    %v218 = vsub.s32 4294967266, %v213
    %v219 = vadd.s32 %v218, 127
    %v220 = vshll.u32 %v219, 23
    %v221 = vor.u32 4788187, %v220
    %v222 = vand.u32 2147483647, %v221
    %v224 = vcvt.s32.f32 %v217
    %v225 = vmul.f32 %v224, %v222
    %v226 = vxor.u32 %v225, 2147483648
    %v227 = vsel %vm144, %v226, %v225
    %v228 = vsub.s32 4, %v204
    %v229 = vsel %vm144, %v228, %v204
    %v230 = vsel %vm143, %v37, %v227
    %v231 = vsel %vm143, 0, %v229
    %v232 = vcosq.f32.pop %v230
    %v233 = vsinq.f32.pop %v230
    %vm234 = vweird.f32 %v37
    %v235 = vand.u32 %v231, 3
    %vm236 = vcmp.lt.s32.totalorder %v235, 2
    %vm237 = vcmp.eq.s32.totalorder %v235, 0
    %v238 = vxor.u32 %v233, 2147483648
    %v239 = vsel %vm237, %v232, %v238
    %vm240 = vcmp.eq.s32.totalorder %v235, 2
    %v241 = vxor.u32 %v232, 2147483648
    %v242 = vsel %vm240, %v241, %v233
    %v243 = vsel %vm236, %v239, %v242
    %v244 = vsel %vm234, nan, %v243
    %v245 = vmul.f32 %v141, %v35
    %246 = vst [vmem:[#allocation5] sm:$0xff] %v245
    %v247 = vmul.f32 %v141, %v244
    %v248 = vadd.f32 %v247, %v247
    %v249 = vmul.f32 %v244, %v244
    %v250 = vmul.f32 %v141, %v141
    %v251 = vsub.f32 %v249, %v250
    %v252 = vmul.f32 %v248, %v35
    %s253 = scalar_lea.vmem [#allocation5], 8
    %254 = vst [vmem:[%s253] sm:$0xff] %v252
    %v255 = vmul.f32 %v248, %v244
    %v256 = vmul.f32 %v251, %v141
    %v257 = vadd.f32 %v255, %v256
    %v258 = vmul.f32 %v251, %v244
    %v259 = vmul.f32 %v248, %v141
    %v260 = vsub.f32 %v258, %v259
    %v261 = vmul.f32 %v257, %v35
    %s262 = scalar_lea.vmem [#allocation5], 16
    %263 = vst [vmem:[%s262] sm:$0xff] %v261
    %v264 = vmul.f32 %v257, %v244
    %v265 = vmul.f32 %v260, %v141
    %v266 = vadd.f32 %v264, %v265
    %v267 = vmul.f32 %v260, %v244
    %v268 = vmul.f32 %v257, %v141
    %v269 = vsub.f32 %v267, %v268
    %v270 = vmul.f32 %v266, %v35
    %s271 = scalar_lea.vmem [#allocation5], 24
    %272 = vst [vmem:[%s271] sm:$0xff] %v270
    %v273 = vmul.f32 %v266, %v244
    %v274 = vmul.f32 %v269, %v141
    %v275 = vadd.f32 %v273, %v274
    %v276 = vmul.f32 %v269, %v244
    %v277 = vmul.f32 %v266, %v141
    %v278 = vsub.f32 %v276, %v277
    %v279 = vmul.f32 %v275, %v35
    %s280 = scalar_lea.vmem [#allocation5], 32
    %281 = vst [vmem:[%s280] sm:$0xff] %v279
    %v282 = vmul.f32 %v275, %v244
    %v283 = vmul.f32 %v278, %v141
    %v284 = vadd.f32 %v282, %v283
    %v285 = vmul.f32 %v278, %v244
    %v286 = vmul.f32 %v275, %v141
    %v287 = vsub.f32 %v285, %v286
    %v288 = vmul.f32 %v284, %v35
    %s289 = scalar_lea.vmem [#allocation5], 40
    %290 = vst [vmem:[%s289] sm:$0xff] %v288
    %v291 = vmul.f32 %v284, %v244
    %v292 = vmul.f32 %v287, %v141
    %v293 = vadd.f32 %v291, %v292
    %v294 = vmul.f32 %v287, %v244
    %v295 = vmul.f32 %v284, %v141
    %v296 = vsub.f32 %v294, %v295
    %v297 = vmul.f32 %v293, %v35
    %s298 = scalar_lea.vmem [#allocation5], 48
    %299 = vst [vmem:[%s298] sm:$0xff] %v297
    %v300 = vmul.f32 %v293, %v244
    %v301 = vmul.f32 %v296, %v141
    %v302 = vadd.f32 %v300, %v301
    %v303 = vmul.f32 %v296, %v244
    %v304 = vmul.f32 %v293, %v141
    %v305 = vsub.f32 %v303, %v304
    %v306 = vmul.f32 %v302, %v35
    %s307 = scalar_lea.vmem [#allocation5], 56
    %308 = vst [vmem:[%s307] sm:$0xff] %v306
    %v309 = vmul.f32 %v302, %v244
    %v310 = vmul.f32 %v305, %v141
    %v311 = vadd.f32 %v309, %v310
    %v312 = vmul.f32 %v305, %v244
    %v313 = vmul.f32 %v302, %v141
    %v314 = vsub.f32 %v312, %v313
    %v315 = vmul.f32 %v311, %v35
    %s316 = scalar_lea.vmem [#allocation5], 64
    %317 = vst [vmem:[%s316] sm:$0xff] %v315
    %v318 = vmul.f32 %v311, %v244
    %v319 = vmul.f32 %v314, %v141
    %v320 = vadd.f32 %v318, %v319
    %v321 = vmul.f32 %v314, %v244
    %v322 = vmul.f32 %v311, %v141
    %v323 = vsub.f32 %v321, %v322
    %v324 = vmul.f32 %v320, %v35
    %s325 = scalar_lea.vmem [#allocation5], 72
    %326 = vst [vmem:[%s325] sm:$0xff] %v324
    %v327 = vmul.f32 %v320, %v244
    %v328 = vmul.f32 %v323, %v141
    %v329 = vadd.f32 %v327, %v328
    %v330 = vmul.f32 %v323, %v244
    %v331 = vmul.f32 %v320, %v141
    %v332 = vsub.f32 %v330, %v331
    %v333 = vmul.f32 %v329, %v35
    %s334 = scalar_lea.vmem [#allocation5], 80
    %335 = vst [vmem:[%s334] sm:$0xff] %v333
    %v336 = vmul.f32 %v329, %v244
    %v337 = vmul.f32 %v332, %v141
    %v338 = vadd.f32 %v336, %v337
    %v339 = vmul.f32 %v332, %v244
    %v340 = vmul.f32 %v329, %v141
    %v341 = vsub.f32 %v339, %v340
    %v342 = vmul.f32 %v338, %v35
    %s343 = scalar_lea.vmem [#allocation5], 88
    %344 = vst [vmem:[%s343] sm:$0xff] %v342
    %v345 = vmul.f32 %v338, %v244
    %v346 = vmul.f32 %v341, %v141
    %v347 = vadd.f32 %v345, %v346
    %v348 = vmul.f32 %v341, %v244
    %v349 = vmul.f32 %v338, %v141
    %v350 = vsub.f32 %v348, %v349
    %v351 = vmul.f32 %v347, %v35
    %s352 = scalar_lea.vmem [#allocation5], 96
    %353 = vst [vmem:[%s352] sm:$0xff] %v351
    %v354 = vmul.f32 %v347, %v244
    %v355 = vmul.f32 %v350, %v141
    %v356 = vadd.f32 %v354, %v355
    %v357 = vmul.f32 %v350, %v244
    %v358 = vmul.f32 %v347, %v141
    %v359 = vsub.f32 %v357, %v358
    %v360 = vmul.f32 %v356, %v35
    %s361 = scalar_lea.vmem [#allocation5], 104
    %362 = vst [vmem:[%s361] sm:$0xff] %v360
    %v363 = vmul.f32 %v356, %v244
    %v364 = vmul.f32 %v359, %v141
    %v365 = vadd.f32 %v363, %v364
    %v366 = vmul.f32 %v359, %v244
    %v367 = vmul.f32 %v356, %v141
    %v368 = vsub.f32 %v366, %v367
    %v369 = vmul.f32 %v365, %v35
    %s370 = scalar_lea.vmem [#allocation5], 112
    %371 = vst [vmem:[%s370] sm:$0xff] %v369
    %v372 = vmul.f32 %v365, %v244
    %v373 = vmul.f32 %v368, %v141
    %v374 = vadd.f32 %v372, %v373
    %v375 = vmul.f32 %v374, %v35
    %s376 = scalar_lea.vmem [#allocation5], 120
    %377 = vst [vmem:[%s376] sm:$0xff] %v375
    // Predicated region
    $region10: #{tpu_custom_call.1} parent=1 // pred_check
      _
    $region11: #{tpu_custom_call.1} parent=1 // pred_check_branch
      %379 = sbr.rel (0) target = $region13
    $region12: #{tpu_custom_call.1} parent=1 // pred_region
      %s381 = ssub.s32 2048, 2048
      %382 = vsyncadd [#allocation4], %s381
      %s383 = sshll.u32 [#allocation5], 4
      %s384 = int_to_ptr.vmem [resolvable:$true] %s383
      %389 = dma.vmem_to_hbm [thread:$0]  %s384, 2048, %s1, [#allocation4], 128, 128, 8
    $region13: #{tpu_custom_call.1} parent=1 // pred_fallthru
      _
    // Predicated region
    $region14: #{tpu_custom_call.1} parent=1 // pred_check
      _
    $region15: #{tpu_custom_call.1} parent=1 // pred_check_branch
      %391 = sbr.rel (0) target = $region17
    $region16: #{tpu_custom_call.1} parent=1 // pred_region
      %392 = dma.done [#allocation4], 2048
    $region17: #{tpu_custom_call.1} parent=1 // pred_fallthru
      _
    %393 = vsyncpa [#allocation3], 1
    %394 = vsyncpa [#allocation4], 1

</llo_original>
